<compile_context>
chip_gen: v7x
topology: tpu7x:2x2x1
jax: 0.10.0
libtpu: 0.0.40
codegen_flags: <defaults>
</compile_context>

<pallas_src>
import jax
import jax.numpy as jnp
from jax.experimental import pallas as pl
from jax.experimental.pallas import tpu as pltpu

_SUBLANE = 8                                # f32 sublane granularity for batch tiles
_VMEM_STREAM_BUDGET = 12 * 1024 * 1024      # double-buffered x + out streams (v5e-safe)
_VMEM_LIMIT_BYTES = 32 * 1024 * 1024        # explicit scoped-VMEM limit (safe on all gens)
_MAX_BLOCK_B = 8192


def _round_up(x, m):
    return ((x + m - 1) // m) * m


def _round_down(x, m):
    return (x // m) * m


def _linear_kernel(x_ref, w_ref, b_ref, o_ref):
    # x_ref: (TB, D)   w_ref: (D, 2)   b_ref: (1, 2)   o_ref: (TB, 2)
    acc = jnp.dot(x_ref[...], w_ref[...], preferred_element_type=jnp.float32)
    o_ref[...] = (acc + b_ref[...]).astype(o_ref.dtype)


def prepare_explainer_params(weight, bias, compute_dtype=None):
    """One-time layout prep: PyTorch (2, D) weight -> (D, 2) RHS, bias -> (1, 2) f32."""
    if compute_dtype is None:
        compute_dtype = weight.dtype
    w_rhs = jnp.asarray(weight).T.astype(compute_dtype)            # (D, 2)
    b_row = jnp.asarray(bias).reshape(1, -1).astype(jnp.float32)   # (1, 2)
    return w_rhs, b_row


def _select_block_b(B, D, itemsize, out_dim, block_b):
    row_in = D * itemsize
    row_out = out_dim * 4  # f32 output rows
    # Double-buffered input AND output streams must fit the budget.
    vmem_cap = max(
        _SUBLANE,
        _round_down(_VMEM_STREAM_BUDGET // (2 * (row_in + row_out)), _SUBLANE))
    if block_b is None:
        block_b = min(_MAX_BLOCK_B, vmem_cap)
        # Keep >= 2-4 grid steps for large B so v7x's two TCs both get work.
        block_b = min(block_b, max(1024, _round_up(pl.cdiv(B, 4), _SUBLANE)))
    else:
        block_b = _round_up(int(block_b), _SUBLANE)
    block_b = max(_SUBLANE, min(block_b, vmem_cap))
    if block_b >= B:
        block_b = B  # single full-extent block: always a legal tile shape
    return block_b


def neuro_symbolic_explainer(features, w_rhs, b_row, *, block_b=None):
    """logits = features @ w_rhs + b_row   (== torch.nn.Linear(D, 2).forward)

    features: (B, D) f32/bf16
    w_rhs:    (D, 2)  pre-transposed weight (see prepare_explainer_params)
    b_row:    (1, 2)  float32
    Returns:  (B, 2)  float32
    """
    B, D = features.shape
    out_dim = w_rhs.shape[1]
    itemsize = jnp.dtype(features.dtype).itemsize

    w_rhs = w_rhs.astype(features.dtype)

    block_b = _select_block_b(B, D, itemsize, out_dim, block_b)
    grid = (pl.cdiv(B, block_b),)

    cost = pl.CostEstimate(
        flops=2 * B * D * out_dim,
        transcendentals=0,
        bytes_accessed=(B * D * itemsize             # features
                        + D * out_dim * itemsize     # weight
                        + out_dim * 4                # bias
                        + B * out_dim * 4),          # logits
    )

    return pl.pallas_call(
        _linear_kernel,
        out_shape=jax.ShapeDtypeStruct((B, out_dim), jnp.float32),
        grid=grid,
        in_specs=[
            pl.BlockSpec((block_b, D), lambda i: (i, 0)),    # batch-tiled features
            pl.BlockSpec((D, out_dim), lambda i: (0, 0)),    # weight, VMEM-resident
            pl.BlockSpec((1, out_dim), lambda i: (0, 0)),    # bias, VMEM-resident
        ],
        out_specs=pl.BlockSpec((block_b, out_dim), lambda i: (i, 0)),
        compiler_params=pltpu.CompilerParams(
            dimension_semantics=("parallel",),   # shard batch steps over TCs (v7x)
            vmem_limit_bytes=_VMEM_LIMIT_BYTES,
        ),
        cost_estimate=cost,
    )(features, w_rhs, b_row)


if __name__ == "__main__":
    key = jax.random.PRNGKey(0)
    k_x, k_w, k_b, k_x2 = jax.random.split(key, 4)

    batch, input_dim, out_dim = 2, 32, 2

    # Deterministic synthetic parameters (PyTorch nn.Linear layout:
    # weight (2, input_dim), bias (2,)).
    bound = 1.0 / jnp.sqrt(input_dim)
    weight = jax.random.uniform(k_w, (out_dim, input_dim),
                                minval=-bound, maxval=bound, dtype=jnp.float32)
    bias = jax.random.uniform(k_b, (out_dim,),
                              minval=-bound, maxval=bound, dtype=jnp.float32)
    features = jax.random.normal(k_x, (batch, input_dim), dtype=jnp.float32)

    # One-time param layout prep (hoisted out of the per-call wrapper).
    w_rhs, b_row = prepare_explainer_params(weight, bias)

    # 1) Demo shape from the module spec.
    logits = neuro_symbolic_explainer(features, w_rhs, b_row)
    jax.block_until_ready(logits)
    ref = features @ weight.T + bias
    assert logits.shape == (batch, out_dim)
    assert jnp.allclose(logits, ref, atol=1e-5, rtol=1e-5)

    # 2) Multi-step grid with a ragged last block (exercises the no-pad path).
    features2 = jax.random.normal(k_x2, (300, input_dim), dtype=jnp.float32)
    logits2 = neuro_symbolic_explainer(features2, w_rhs, b_row, block_b=128)
    jax.block_until_ready(logits2)
    ref2 = features2 @ weight.T + bias
    assert logits2.shape == (300, out_dim)
    assert jnp.allclose(logits2, ref2, atol=1e-5, rtol=1e-5)

    print("KERNEL_OK")
</pallas_src>

<mosaic_0001>
module attributes {stable_mosaic.version = 11 : i64} {
  func.func @_linear_kernel(%arg0: i32, %arg1: memref<2x32xf32, #tpu.memory_space<vmem>>, %arg2: memref<32x2xf32, #tpu.memory_space<vmem>>, %arg3: memref<1x2xf32, #tpu.memory_space<vmem>>, %arg4: memref<2x2xf32, #tpu.memory_space<vmem>>) attributes {dimension_semantics = [#tpu.dimension_semantics<parallel>], iteration_bounds = array<i64: 1>, scalar_prefetch = 0 : i64, scratch_operands = 0 : i64, tpu.core_type = #tpu.core_type<tc>, window_params = [{transform_indices = @transform_0, window_bounds = array<i64: 2, 32>}, {pipeline_mode = #tpu.pipeline_mode<synchronous>, transform_indices = @transform_1, window_bounds = array<i64: 32, 2>}, {pipeline_mode = #tpu.pipeline_mode<synchronous>, transform_indices = @transform_2, window_bounds = array<i64: 1, 2>}, {transform_indices = @transform_3, window_bounds = array<i64: 2, 2>}]} {
    %c0 = arith.constant 0 : index
    %c0_0 = arith.constant 0 : index
    %0 = vector.load %arg1[%c0, %c0_0] : memref<2x32xf32, #tpu.memory_space<vmem>>, vector<2x32xf32>
    %c0_1 = arith.constant 0 : index
    %c0_2 = arith.constant 0 : index
    %1 = vector.load %arg2[%c0_1, %c0_2] : memref<32x2xf32, #tpu.memory_space<vmem>>, vector<32x2xf32>
    %cst = arith.constant dense<0.000000e+00> : vector<2x2xf32>
    %2 = tpu.matmul %0, %1, %cst {dimension_numbers = #tpu.dot_dimension_numbers<[1], [0], [0], [1], [0, 0, 1, 1], [], []>} : vector<2x32xf32>, vector<32x2xf32>, vector<2x2xf32> -> vector<2x2xf32>
    %c0_3 = arith.constant 0 : index
    %c0_4 = arith.constant 0 : index
    %3 = vector.load %arg3[%c0_3, %c0_4] : memref<1x2xf32, #tpu.memory_space<vmem>>, vector<1x2xf32>
    %4 = vector.broadcast %3 : vector<1x2xf32> to vector<2x2xf32>
    %5 = arith.addf %2, %4 : vector<2x2xf32>
    %c0_5 = arith.constant 0 : index
    %c0_6 = arith.constant 0 : index
    %6 = vector.load %arg4[%c0_5, %c0_6] : memref<2x2xf32, #tpu.memory_space<vmem>>, vector<2x2xf32>
    tpu.vector_store %arg4[%c0_5, %c0_6], %5 {strides = array<i32>} : memref<2x2xf32, #tpu.memory_space<vmem>>, vector<2x2xf32>,
    return
  }
  func.func @transform_0(%arg0: i32) -> (i32, i32) {
    %c0_i32 = arith.constant 0 : i32
    %c0_i32_0 = arith.constant 0 : i32
    return %arg0, %c0_i32 : i32, i32
  }
  func.func @transform_1(%arg0: i32) -> (i32, i32) {
    %c0_i32 = arith.constant 0 : i32
    %c0_i32_0 = arith.constant 0 : i32
    %c0_i32_1 = arith.constant 0 : i32
    return %c0_i32, %c0_i32_0 : i32, i32
  }
  func.func @transform_2(%arg0: i32) -> (i32, i32) {
    %c0_i32 = arith.constant 0 : i32
    %c0_i32_0 = arith.constant 0 : i32
    %c0_i32_1 = arith.constant 0 : i32
    return %c0_i32, %c0_i32_0 : i32, i32
  }
  func.func @transform_3(%arg0: i32) -> (i32, i32) {
    %c0_i32 = arith.constant 0 : i32
    %c0_i32_0 = arith.constant 0 : i32
    return %arg0, %c0_i32 : i32, i32
  }
}

</mosaic_0001>

<llo_original>
// kernel: tpu_custom_call.1
$region0: #{tpu_custom_call.1}
  #allocation0 [shape = 'u32[]', space=smem, size = 0x4, offset = 0x4, fixed_abs, tag = 'smem constant byte address 0x4 - core index']
  #allocation1 [shape = 'u32[144,128]{1,0:T(1,128)}', space=vmem, size = 0x12000, scoped, tag = 'internal scratch']
  %s0 = inlined_call_operand.vmem [shape: f32[2,32], index: 0, kind: input, shape index: {}]
  %s1 = inlined_call_operand.vmem [shape: f32[32,2], index: 1, kind: input, shape index: {}]
  %s2 = inlined_call_operand.vmem [shape: f32[1,2], index: 2, kind: input, shape index: {}]
  %s3 = inlined_call_operand.hbm [shape: f32[2,2], index: 3, kind: output, shape index: {}]
  %s4 = sld [smem:[#allocation0]]
  $region22: #{tpu_custom_call.1} parent=0
    _
  %s6 = ssub.s32 1, %s4
  %s7 = scalar_select 0, %s6, %s4
  $region1: #{tpu_custom_call.1} parent=0
    #allocation2 [shape = 'u8[1024]{0}', space=vmem, size = 0x400, scoped, tag = 'output window, operand 0, single buffered']
    #allocation3 [shape = 's32[1]{0}', space=sflag, size = 0x4, scoped, tag = 'scoped memory for tpu_custom_call.1']
    %8 = vsyncpa [#allocation3], 0
    // Predicated region
    $region2: #{tpu_custom_call.1} parent=1 // pred_check
      _
    $region3: #{tpu_custom_call.1} parent=1 // pred_check_branch
      %10 = sbr.rel (0) target = $region5
    $region4: #{tpu_custom_call.1} parent=1 // pred_region
      _
    $region5: #{tpu_custom_call.1} parent=1 // pred_fallthru
      _
    // Predicated region
    $region6: #{tpu_custom_call.1} parent=1 // pred_check
      _
    $region7: #{tpu_custom_call.1} parent=1 // pred_check_branch
      %12 = sbr.rel (0) target = $region9
    $region8: #{tpu_custom_call.1} parent=1 // pred_region
      _
    $region9: #{tpu_custom_call.1} parent=1 // pred_fallthru
      _
    // Predicated region
    $region10: #{tpu_custom_call.1} parent=1 // pred_check
      _
    $region11: #{tpu_custom_call.1} parent=1 // pred_check_branch
      %14 = sbr.rel (0) target = $region13
    $region12: #{tpu_custom_call.1} parent=1 // pred_region
      _
    $region13: #{tpu_custom_call.1} parent=1 // pred_fallthru
      _
    %v15 = vld [vmem:[%s0] sm:$0x3]
    %v16 = vld [vmem:[%s1] sm:$0xff]
    %v17 = vld [vmem:[%s1 + $0x8] sm:$0xff]
    %v18 = vld [vmem:[%s1 + $0x10] sm:$0xff]
    %v19 = vld [vmem:[%s1 + $0x18] sm:$0xff]
    %v20 = vld [vmem:[%s2] sm:$0x1]
    %v22 = vlaneseq
    %v23 = vshrl.u32 %v22, 7
    %v24 = vsub.s32 0, %v23
    %v25 = vrot.slane %v20, %v24
    %vm27 = vcmask 261120
    %v29 = vsel %vm27, %v15, 0
    %31 = vmatprep.subr.mxu0 0.0
    %32 = vmatpush1.msra.mxu0 %v16
    %33 = vmatprep.subr.mxu0 0.0
    %34 = vmatpush1.msra.mxu0 %v17
    %35 = vmatprep.subr.mxu0 0.0
    %36 = vmatpush1.msra.mxu0 %v18
    %37 = vmatprep.subr.mxu0 0.0
    %38 = vmatpush1.msra.mxu0 %v19
    %39 = vmatprep.subr.mxu0 0.0
    %40 = vmatpush1.msra.mxu0 0.0
    %41 = vmatprep.subr.mxu0 0.0
    %42 = vmatpush1.msra.mxu0 0.0
    %43 = vmatprep.subr.mxu0 0.0
    %44 = vmatpush1.msra.mxu0 0.0
    %45 = vmatprep.subr.mxu0 0.0
    %46 = vmatpush1.msra.mxu0 0.0
    %47 = vmatprep.subr.mxu0 0.0
    %48 = vmatpush1.msra.mxu0 0.0
    %49 = vmatprep.subr.mxu0 0.0
    %50 = vmatpush1.msra.mxu0 0.0
    %51 = vmatprep.subr.mxu0 0.0
    %52 = vmatpush1.msra.mxu0 0.0
    %53 = vmatprep.subr.mxu0 0.0
    %54 = vmatpush1.msra.mxu0 0.0
    %55 = vmatprep.subr.mxu0 0.0
    %56 = vmatpush1.msra.mxu0 0.0
    %57 = vmatprep.subr.mxu0 0.0
    %58 = vmatpush1.msra.mxu0 0.0
    %59 = vmatprep.subr.mxu0 0.0
    %60 = vmatpush1.msra.mxu0 0.0
    %61 = vmatprep.subr.mxu0 0.0
    %62 = vmatpush1.msra.mxu0 0.0
    %63 = vmatprep.subr.mxu0 0.0
    %64 = vmatpush1.msra.mxu0 0.0
    %65 = vmatprep.subr.mxu0 0.0
    %66 = vmatpush1.msra.mxu0 0.0
    %67 = vmatprep.subr.mxu0 0.0
    %68 = vmatpush1.msra.mxu0 0.0
    %69 = vmatprep.subr.mxu0 0.0
    %70 = vmatpush1.msra.mxu0 0.0
    %71 = vmatprep.subr.mxu0 0.0
    %72 = vmatpush1.msra.mxu0 0.0
    %73 = vmatprep.subr.mxu0 0.0
    %74 = vmatpush1.msra.mxu0 0.0
    %75 = vmatprep.subr.mxu0 0.0
    %76 = vmatpush1.msra.mxu0 0.0
    %77 = vmatprep.subr.mxu0 0.0
    %78 = vmatpush1.msra.mxu0 0.0
    %79 = vmatprep.subr.mxu0 0.0
    %80 = vmatpush1.msra.mxu0 0.0
    %81 = vmatprep.subr.mxu0 0.0
    %82 = vmatpush1.msra.mxu0 0.0
    %83 = vmatprep.subr.mxu0 0.0
    %84 = vmatpush1.msra.mxu0 0.0
    %85 = vmatprep.subr.mxu0 0.0
    %86 = vmatpush1.msra.mxu0 0.0
    %87 = vmatprep.subr.mxu0 0.0
    %88 = vmatpush1.msra.mxu0 0.0
    %89 = vmatprep.subr.mxu0 0.0
    %90 = vmatpush1.msra.mxu0 0.0
    %91 = vmatprep.subr.mxu0 0.0
    %92 = vmatpush1.msra.mxu0 0.0
    %93 = vmatprep.subr.mxu0 0.0
    %94 = vmatpush1.msra.mxu0 0.0
    %95 = vmatprep.mubr.f32.mxu0 0.0
    %96 = vmatmul.mubr.f32.gmra.mrb[0].mxu0 %v29
    %v97 = vpop.f32.mrb[0].mxu0
    %v98 = vadd.f32 %v25, %v97
    %v99 = vpop.f32.mrb[0].mxu0
    %100 = vdwg.mxu0
    %vm101 = vcmask 9216
    %102 = vst.msk [vmem:[#allocation2] sm:$0x3] %vm101, %v98
    // Predicated region
    $region14: #{tpu_custom_call.1} parent=1 // pred_check
      _
    $region15: #{tpu_custom_call.1} parent=1 // pred_check_branch
      %104 = sbr.rel (0) target = $region17
    $region16: #{tpu_custom_call.1} parent=1 // pred_region
      %s106 = ssub.s32 32, 32
      %107 = vsyncadd [#allocation3], %s106
      %s109 = sshll.u32 [#allocation2], 4
      %s110 = int_to_ptr.vmem [resolvable:$true] %s109
      %112 = dma.vmem_to_hbm [thread:$0]  %s110, 32, %s3, [#allocation3]
    $region17: #{tpu_custom_call.1} parent=1 // pred_fallthru
      _
    // Predicated region
    $region18: #{tpu_custom_call.1} parent=1 // pred_check
      _
    $region19: #{tpu_custom_call.1} parent=1 // pred_check_branch
      %114 = sbr.rel (0) target = $region21
    $region20: #{tpu_custom_call.1} parent=1 // pred_region
      %115 = dma.done [#allocation3], 32
    $region21: #{tpu_custom_call.1} parent=1 // pred_fallthru
      _
    %116 = vsyncpa [#allocation3], 1

</llo_original>
